<compile_context>
chip_gen: v6e
topology: v6e:2x2x1
jax: 0.10.0
libtpu: 0.0.40
codegen_flags: <defaults>
</compile_context>

<pallas_src>
import functools

import jax
import jax.numpy as jnp
from jax.experimental import pallas as pl
from jax.experimental.pallas import tpu as pltpu


# ---------------------------------------------------------------------------
# Device introspection (trace-time / host-side only).
# ---------------------------------------------------------------------------
def _device_kind():
    try:
        return jax.devices()[0].device_kind.lower()
    except Exception:  # pragma: no cover - non-TPU fallback
        return ""


def _has_bf16_vpu():
    # v5e has no bf16 VPU; v6e / v7x do.
    kind = _device_kind()
    return "v5" not in kind


def _num_tensorcores_per_chip():
    # v7x exposes 2 TensorCores per chip to a single Pallas grid via
    # dimension_semantics=("parallel",); earlier generations have 1.
    kind = _device_kind()
    return 2 if ("7" in kind) else 1


# ---------------------------------------------------------------------------
# Kernel
# ---------------------------------------------------------------------------
@functools.lru_cache(maxsize=None)
def _mlp_kernel(num_layers, relu_in_bf16):
    """Fused MLP kernel for `num_layers` linear layers.

    refs layout: (x, w1, b1, ..., wL, bL, out)
      x   : (tile, S)  f32   -- cast to bf16 in-kernel
      wl  : (in, out)  bf16  -- VMEM resident
      bl  : (1, out)   f32   -- VMEM resident
      out : (tile, A)  f32
    """

    def kernel(*refs):
        x_ref = refs[0]
        o_ref = refs[-1]
        wb_refs = refs[1:-1]

        # In-kernel f32 -> bf16 cast (free VPU filler, halves input HBM bytes
        # vs. a wrapper-side cast pass).
        h = x_ref[...].astype(jnp.bfloat16)

        for l in range(num_layers):
            w = wb_refs[2 * l][...]           # (in, out) bf16
            b = wb_refs[2 * l + 1][...]       # (1, out)  f32
            # MXU matmul, f32 accumulation; bias-add in f32.
            h = jnp.dot(h, w, preferred_element_type=jnp.float32) + b
            if l < num_layers - 1:
                if relu_in_bf16:
                    # bf16-VPU chips (v6e/v7x): downcast first, ReLU in bf16
                    # -> half the VALU / pack work for the elementwise pass.
                    h = jnp.maximum(h.astype(jnp.bfloat16),
                                    jnp.bfloat16(0))
                else:
                    # v5e: no bf16 VPU -> ReLU in f32, then downcast for MXU.
                    h = jnp.maximum(h, 0.0).astype(jnp.bfloat16)

        o_ref[...] = h.astype(o_ref.dtype)

    return kernel


def _round_up(x, m):
    return ((x + m - 1) // m) * m


# ---------------------------------------------------------------------------
# Wrapper
# ---------------------------------------------------------------------------
def dqn_forward(states, params, *, tile_rows=2048):
    """Q(s, .) for states of shape (*, S) -> (*, A) float32.

    params: list of (w, b) per linear layer; w is (in, out) (transposed w.r.t.
    torch.nn.Linear) and b is (out,) or (1, out).
    """
    num_layers = len(params)
    S = params[0][0].shape[0]
    A = params[-1][0].shape[1]
    assert states.shape[-1] == S

    lead = states.shape[:-1]
    x = states.reshape(-1, S).astype(jnp.float32)   # f32 stream; cast in-kernel
    n = x.shape[0]

    # Row tile: as large as requested, but no larger than the (sublane-aligned)
    # batch, and a multiple of 8.  No padded copy of x: grid uses cdiv and the
    # trailing partial block is masked by Pallas on writeback.
    tile = max(8, min(_round_up(tile_rows, 8), _round_up(n, 8)))

    # On multi-TensorCore chips (v7x) make sure the "parallel" batch axis has
    # >= num_tc grid steps so both cores get work (no-op on v5e/v6e).
    num_tc = _num_tensorcores_per_chip()
    if num_tc > 1 and n > 8:
        tile = max(8, min(tile, _round_up(pl.cdiv(n, num_tc), 8)))

    grid = (pl.cdiv(n, tile),)

    # Grid-invariant operands: whole arrays resident in VMEM (no pipelining).
    resident = pl.BlockSpec(memory_space=pltpu.MemorySpace.VMEM)
    wb_args = []
    in_specs = [pl.BlockSpec((tile, S), lambda i: (i, 0))]
    weight_bytes = 0
    for w, b in params:
        # No-ops under jit when params come from init_dqn_params (pre-cast).
        w_bf = w.astype(jnp.bfloat16)
        b_f32 = jnp.asarray(b, jnp.float32).reshape(1, -1)
        wb_args.append(w_bf)
        wb_args.append(b_f32)
        in_specs.extend([resident, resident])
        weight_bytes += w_bf.size * 2 + b_f32.size * 4

    # Advisory cost estimate for the XLA scheduler.
    flops = 0
    for w, _ in params:
        flops += 2 * n * w.shape[0] * w.shape[1]
    bytes_accessed = n * S * 4 + n * A * 4 + weight_bytes
    cost = pl.CostEstimate(flops=flops, transcendentals=0,
                           bytes_accessed=bytes_accessed)

    out = pl.pallas_call(
        _mlp_kernel(num_layers, _has_bf16_vpu()),
        out_shape=jax.ShapeDtypeStruct((n, A), jnp.float32),
        grid_spec=pltpu.PrefetchScalarGridSpec(
            num_scalar_prefetch=0,
            grid=grid,
            in_specs=in_specs,
            out_specs=pl.BlockSpec((tile, A), lambda i: (i, 0)),
        ),
        compiler_params=pltpu.CompilerParams(
            dimension_semantics=("parallel",)),
        cost_estimate=cost,
    )(x, *wb_args)

    return out.reshape(*lead, A)


# ---------------------------------------------------------------------------
# Params (PyTorch nn.Linear-style init) and references
# ---------------------------------------------------------------------------
def init_dqn_params(key, state_dim, action_dim, *, num_layers=3,
                    hidden_dim=256):
    """PyTorch nn.Linear-style uniform init.

    Weights are stored (in, out) and pre-cast to bf16 once here (so the
    per-call astype is a no-op); biases stay f32 with shape (1, out).
    """
    dims = [state_dim] + [hidden_dim] * (num_layers - 1) + [action_dim]
    keys = jax.random.split(key, num_layers)
    params = []
    for l in range(num_layers):
        fan_in, fan_out = dims[l], dims[l + 1]
        kw, kb = jax.random.split(keys[l])
        bound = 1.0 / (fan_in ** 0.5)
        w = jax.random.uniform(kw, (fan_in, fan_out), jnp.float32,
                               -bound, bound)
        b = jax.random.uniform(kb, (1, fan_out), jnp.float32, -bound, bound)
        params.append((w.astype(jnp.bfloat16), b))
    return params


def dqn_reference_f32(states, params):
    """Plain-JAX f32 reference (module semantics with the given weights)."""
    h = states.astype(jnp.float32)
    for l, (w, b) in enumerate(params):
        h = jnp.dot(h, w.astype(jnp.float32)) + b.reshape(-1)
        if l < len(params) - 1:
            h = jnp.maximum(h, 0.0)
    return h


def dqn_reference_bf16(states, params):
    """Plain-JAX reference mimicking the kernel's bf16/f32 dtype path."""
    h = states.astype(jnp.bfloat16)
    for l, (w, b) in enumerate(params):
        h = jnp.dot(h, w.astype(jnp.bfloat16),
                    preferred_element_type=jnp.float32)
        h = h + b.reshape(-1).astype(jnp.float32)
        if l < len(params) - 1:
            h = jnp.maximum(h, 0.0).astype(jnp.bfloat16)
    return h


if __name__ == "__main__":
    # TODO(synk): custom_load / custom_dump are host-side (de)serialization,
    # not kernel work; they are intentionally not translated.
    state_dim, action_dim, hidden_dim, num_layers = 8, 4, 256, 3
    batch_shape = (2, 8)          # forward supports arbitrary (*, S)

    key = jax.random.PRNGKey(0)
    kp, kx = jax.random.split(key)
    params = init_dqn_params(kp, state_dim, action_dim,
                             num_layers=num_layers, hidden_dim=hidden_dim)
    states = jax.random.normal(kx, (*batch_shape, state_dim), jnp.float32)

    fwd = jax.jit(functools.partial(dqn_forward, params=params))
    q = jax.block_until_ready(fwd(states))

    assert q.shape == (*batch_shape, action_dim), q.shape

    q_bf = dqn_reference_bf16(states, params)    # same dtype path -> tight
    q_f32 = dqn_reference_f32(states, params)    # pure f32 math -> loose
    err_bf = float(jnp.max(jnp.abs(q - q_bf)))
    err_f32 = float(jnp.max(jnp.abs(q - q_f32)))
    assert err_bf < 1e-3, err_bf
    assert err_f32 < 5e-2, err_f32

    print("KERNEL_OK")
</pallas_src>

<mosaic_0001>
module attributes {stable_mosaic.version = 11 : i64} {
  func.func @kernel(%arg0: i32, %arg1: memref<16x8xf32, #tpu.memory_space<vmem>>, %arg2: memref<8x256xbf16, #tpu.memory_space<vmem>>, %arg3: memref<1x256xf32, #tpu.memory_space<vmem>>, %arg4: memref<256x256xbf16, #tpu.memory_space<vmem>>, %arg5: memref<1x256xf32, #tpu.memory_space<vmem>>, %arg6: memref<256x4xbf16, #tpu.memory_space<vmem>>, %arg7: memref<1x4xf32, #tpu.memory_space<vmem>>, %arg8: memref<16x4xf32, #tpu.memory_space<vmem>>) attributes {dimension_semantics = [#tpu.dimension_semantics<parallel>], iteration_bounds = array<i64: 1>, scalar_prefetch = 0 : i64, scratch_operands = 0 : i64, tpu.core_type = #tpu.core_type<tc>, window_params = [{transform_indices = @transform_0, window_bounds = array<i64: 16, 8>}, {pipeline_mode = #tpu.pipeline_mode<synchronous>, transform_indices = @transform_1, window_bounds = array<i64: 8, 256>}, {pipeline_mode = #tpu.pipeline_mode<synchronous>, transform_indices = @transform_2, window_bounds = array<i64: 1, 256>}, {pipeline_mode = #tpu.pipeline_mode<synchronous>, transform_indices = @transform_3, window_bounds = array<i64: 256, 256>}, {pipeline_mode = #tpu.pipeline_mode<synchronous>, transform_indices = @transform_4, window_bounds = array<i64: 1, 256>}, {pipeline_mode = #tpu.pipeline_mode<synchronous>, transform_indices = @transform_5, window_bounds = array<i64: 256, 4>}, {pipeline_mode = #tpu.pipeline_mode<synchronous>, transform_indices = @transform_6, window_bounds = array<i64: 1, 4>}, {transform_indices = @transform_7, window_bounds = array<i64: 16, 4>}]} {
    %c0 = arith.constant 0 : index
    %c0_0 = arith.constant 0 : index
    %0 = vector.load %arg1[%c0, %c0_0] : memref<16x8xf32, #tpu.memory_space<vmem>>, vector<16x8xf32>
    %1 = arith.truncf %0 : vector<16x8xf32> to vector<16x8xbf16>
    %c0_1 = arith.constant 0 : index
    %c0_2 = arith.constant 0 : index
    %2 = vector.load %arg2[%c0_1, %c0_2] : memref<8x256xbf16, #tpu.memory_space<vmem>>, vector<8x256xbf16>
    %c0_3 = arith.constant 0 : index
    %c0_4 = arith.constant 0 : index
    %3 = vector.load %arg3[%c0_3, %c0_4] : memref<1x256xf32, #tpu.memory_space<vmem>>, vector<1x256xf32>
    %cst = arith.constant dense<0.000000e+00> : vector<16x256xf32>
    %4 = tpu.matmul %1, %2, %cst {dimension_numbers = #tpu.dot_dimension_numbers<[1], [0], [0], [1], [0, 0, 1, 1], [], []>} : vector<16x8xbf16>, vector<8x256xbf16>, vector<16x256xf32> -> vector<16x256xf32>
    %5 = vector.broadcast %3 : vector<1x256xf32> to vector<16x256xf32>
    %6 = arith.addf %4, %5 : vector<16x256xf32>
    %7 = arith.truncf %6 : vector<16x256xf32> to vector<16x256xbf16>
    %cst_5 = arith.constant 0.000000e+00 : bf16
    %8 = vector.broadcast %cst_5 : bf16 to vector<16x256xbf16>
    %9 = arith.maximumf %7, %8 : vector<16x256xbf16>
    %c0_6 = arith.constant 0 : index
    %c0_7 = arith.constant 0 : index
    %10 = vector.load %arg4[%c0_6, %c0_7] : memref<256x256xbf16, #tpu.memory_space<vmem>>, vector<256x256xbf16>
    %c0_8 = arith.constant 0 : index
    %c0_9 = arith.constant 0 : index
    %11 = vector.load %arg5[%c0_8, %c0_9] : memref<1x256xf32, #tpu.memory_space<vmem>>, vector<1x256xf32>
    %cst_10 = arith.constant dense<0.000000e+00> : vector<16x256xf32>
    %12 = tpu.matmul %9, %10, %cst_10 {dimension_numbers = #tpu.dot_dimension_numbers<[1], [0], [0], [1], [0, 0, 1, 1], [], []>} : vector<16x256xbf16>, vector<256x256xbf16>, vector<16x256xf32> -> vector<16x256xf32>
    %13 = vector.broadcast %11 : vector<1x256xf32> to vector<16x256xf32>
    %14 = arith.addf %12, %13 : vector<16x256xf32>
    %15 = arith.truncf %14 : vector<16x256xf32> to vector<16x256xbf16>
    %cst_11 = arith.constant 0.000000e+00 : bf16
    %16 = vector.broadcast %cst_11 : bf16 to vector<16x256xbf16>
    %17 = arith.maximumf %15, %16 : vector<16x256xbf16>
    %c0_12 = arith.constant 0 : index
    %c0_13 = arith.constant 0 : index
    %18 = vector.load %arg6[%c0_12, %c0_13] : memref<256x4xbf16, #tpu.memory_space<vmem>>, vector<256x4xbf16>
    %c0_14 = arith.constant 0 : index
    %c0_15 = arith.constant 0 : index
    %19 = vector.load %arg7[%c0_14, %c0_15] : memref<1x4xf32, #tpu.memory_space<vmem>>, vector<1x4xf32>
    %cst_16 = arith.constant dense<0.000000e+00> : vector<16x4xf32>
    %20 = tpu.matmul %17, %18, %cst_16 {dimension_numbers = #tpu.dot_dimension_numbers<[1], [0], [0], [1], [0, 0, 1, 1], [], []>} : vector<16x256xbf16>, vector<256x4xbf16>, vector<16x4xf32> -> vector<16x4xf32>
    %21 = vector.broadcast %19 : vector<1x4xf32> to vector<16x4xf32>
    %22 = arith.addf %20, %21 : vector<16x4xf32>
    %c0_17 = arith.constant 0 : index
    %c0_18 = arith.constant 0 : index
    %23 = vector.load %arg8[%c0_17, %c0_18] : memref<16x4xf32, #tpu.memory_space<vmem>>, vector<16x4xf32>
    tpu.vector_store %arg8[%c0_17, %c0_18], %22 {strides = array<i32>} : memref<16x4xf32, #tpu.memory_space<vmem>>, vector<16x4xf32>,
    return
  }
  func.func @transform_0(%arg0: i32) -> (i32, i32) {
    %c0_i32 = arith.constant 0 : i32
    %c0_i32_0 = arith.constant 0 : i32
    return %arg0, %c0_i32 : i32, i32
  }
  func.func @transform_1(%arg0: i32) -> (i32, i32) {
    %c0_i32 = arith.constant 0 : i32
    %c0_i32_0 = arith.constant 0 : i32
    %c0_i32_1 = arith.constant 0 : i32
    return %c0_i32, %c0_i32_0 : i32, i32
  }
  func.func @transform_2(%arg0: i32) -> (i32, i32) {
    %c0_i32 = arith.constant 0 : i32
    %c0_i32_0 = arith.constant 0 : i32
    %c0_i32_1 = arith.constant 0 : i32
    return %c0_i32, %c0_i32_0 : i32, i32
  }
  func.func @transform_3(%arg0: i32) -> (i32, i32) {
    %c0_i32 = arith.constant 0 : i32
    %c0_i32_0 = arith.constant 0 : i32
    %c0_i32_1 = arith.constant 0 : i32
    return %c0_i32, %c0_i32_0 : i32, i32
  }
  func.func @transform_4(%arg0: i32) -> (i32, i32) {
    %c0_i32 = arith.constant 0 : i32
    %c0_i32_0 = arith.constant 0 : i32
    %c0_i32_1 = arith.constant 0 : i32
    return %c0_i32, %c0_i32_0 : i32, i32
  }
  func.func @transform_5(%arg0: i32) -> (i32, i32) {
    %c0_i32 = arith.constant 0 : i32
    %c0_i32_0 = arith.constant 0 : i32
    %c0_i32_1 = arith.constant 0 : i32
    return %c0_i32, %c0_i32_0 : i32, i32
  }
  func.func @transform_6(%arg0: i32) -> (i32, i32) {
    %c0_i32 = arith.constant 0 : i32
    %c0_i32_0 = arith.constant 0 : i32
    %c0_i32_1 = arith.constant 0 : i32
    return %c0_i32, %c0_i32_0 : i32, i32
  }
  func.func @transform_7(%arg0: i32) -> (i32, i32) {
    %c0_i32 = arith.constant 0 : i32
    %c0_i32_0 = arith.constant 0 : i32
    return %arg0, %c0_i32 : i32, i32
  }
}

</mosaic_0001>

<llo_original>
// kernel: dqn_forward.1
$region0: #{dqn_forward.1}
  #allocation0 [shape = 'u32[]', space=smem, size = 0x4, offset = 0x4, fixed_abs, tag = 'smem constant byte address 0x4 - core index']
  #allocation1 [shape = 'u32[144,128]{1,0:T(1,128)}', space=vmem, size = 0x12000, scoped, tag = 'internal scratch']
  %s0 = inlined_call_operand.hbm [shape: f32[16,8], index: 0, kind: input, shape index: {}]
  %s1 = inlined_call_operand.hbm [shape: bf16[8,256], index: 1, kind: input, shape index: {}]
  %s2 = inlined_call_operand.vmem [shape: f32[1,256], index: 2, kind: input, shape index: {}]
  %s3 = inlined_call_operand.hbm [shape: bf16[256,256], index: 3, kind: input, shape index: {}]
  %s4 = inlined_call_operand.vmem [shape: f32[1,256], index: 4, kind: input, shape index: {}]
  %s5 = inlined_call_operand.hbm [shape: bf16[256,4], index: 5, kind: input, shape index: {}]
  %s6 = inlined_call_operand.vmem [shape: f32[1,4], index: 6, kind: input, shape index: {}]
  %s7 = inlined_call_operand.vmem [shape: f32[16,4], index: 7, kind: output, shape index: {}]
  %s8 = sld [smem:[#allocation0]]
  $region54: #{dqn_forward.1} parent=0
    _
  %s10 = ssub.s32 1, %s8
  %s11 = scalar_select 0, %s10, %s8
  $region1: #{dqn_forward.1} parent=0
    #allocation2 [shape = 'u8[8192]{0}', space=vmem, size = 0x2000, scoped, tag = 'input window, operand 0, single buffered']
    #allocation3 [shape = 's32[1]{0}', space=sflag, size = 0x4, scoped, tag = 'scoped memory for dqn_forward.1']
    #allocation4 [shape = 'u8[4096]{0}', space=vmem, size = 0x1000, scoped, tag = 'input window, operand 1, single buffered']
    #allocation5 [shape = 's32[1]{0}', space=sflag, size = 0x4, scoped, tag = 'scoped memory for dqn_forward.1']
    #allocation6 [shape = 'u8[131072]{0}', space=vmem, size = 0x20000, scoped, tag = 'input window, operand 3, single buffered']
    #allocation7 [shape = 'u8[65536]{0}', space=vmem, size = 0x10000, scoped, tag = 'input window, operand 5, single buffered']
    #allocation8 [shape = 's32[1]{0}', space=sflag, size = 0x4, scoped, tag = 'scoped memory for dqn_forward.1']
    %12 = vsyncpa [#allocation3], 0
    %13 = vsyncpa [#allocation5], 0
    %14 = vsyncpa [#allocation8], 0
    // Predicated region
    $region2: #{dqn_forward.1} parent=1 // pred_check
      _
    $region3: #{dqn_forward.1} parent=1 // pred_check_branch
      %16 = sbr.rel (0) target = $region5
    $region4: #{dqn_forward.1} parent=1 // pred_region
      %s18 = ssub.s32 256, 256
      %19 = vsyncadd [#allocation3], %s18
      %s20 = sshll.u32 [#allocation2], 4
      %s21 = int_to_ptr.vmem [resolvable:$true] %s20
      %26 = dma.hbm_to_vmem [thread:$0]  %s0, 256, %s21, [#allocation3], 128, 128, 8
    $region5: #{dqn_forward.1} parent=1 // pred_fallthru
      _
    // Predicated region
    $region6: #{dqn_forward.1} parent=1 // pred_check
      _
    $region7: #{dqn_forward.1} parent=1 // pred_check_branch
      %28 = sbr.rel (0) target = $region9
    $region8: #{dqn_forward.1} parent=1 // pred_region
      %s30 = ssub.s32 128, 128
      %31 = vsyncadd [#allocation5], %s30
      %s33 = sshll.u32 [#allocation4], 4
      %s34 = int_to_ptr.vmem [resolvable:$true] %s33
      %36 = dma.hbm_to_vmem [thread:$0]  %s1, 128, %s34, [#allocation5]
    $region9: #{dqn_forward.1} parent=1 // pred_fallthru
      _
    // Predicated region
    $region10: #{dqn_forward.1} parent=1 // pred_check
      _
    $region11: #{dqn_forward.1} parent=1 // pred_check_branch
      %38 = sbr.rel (0) target = $region13
    $region12: #{dqn_forward.1} parent=1 // pred_region
      _
    $region13: #{dqn_forward.1} parent=1 // pred_fallthru
      _
    // Predicated region
    $region14: #{dqn_forward.1} parent=1 // pred_check
      _
    $region15: #{dqn_forward.1} parent=1 // pred_check_branch
      %40 = sbr.rel (0) target = $region17
    $region16: #{dqn_forward.1} parent=1 // pred_region
      %s42 = ssub.s32 4096, 4096
      %43 = vsyncadd [#allocation5], %s42
      %s44 = sshll.u32 [#allocation6], 4
      %s45 = int_to_ptr.vmem [resolvable:$true] %s44
      %50 = dma.hbm_to_vmem [thread:$0]  %s3, 4096, %s45, [#allocation5], 128, 128, 8
    $region17: #{dqn_forward.1} parent=1 // pred_fallthru
      _
    // Predicated region
    $region18: #{dqn_forward.1} parent=1 // pred_check
      _
    $region19: #{dqn_forward.1} parent=1 // pred_check_branch
      %52 = sbr.rel (0) target = $region21
    $region20: #{dqn_forward.1} parent=1 // pred_region
      _
    $region21: #{dqn_forward.1} parent=1 // pred_fallthru
      _
    // Predicated region
    $region22: #{dqn_forward.1} parent=1 // pred_check
      _
    $region23: #{dqn_forward.1} parent=1 // pred_check_branch
      %54 = sbr.rel (0) target = $region25
    $region24: #{dqn_forward.1} parent=1 // pred_region
      %s56 = ssub.s32 2048, 2048
      %57 = vsyncadd [#allocation8], %s56
      %s58 = sshll.u32 [#allocation7], 4
      %s59 = int_to_ptr.vmem [resolvable:$true] %s58
      %64 = dma.hbm_to_vmem [thread:$0]  %s5, 2048, %s59, [#allocation8], 64, 64, 4
    $region25: #{dqn_forward.1} parent=1 // pred_fallthru
      _
    // Predicated region
    $region26: #{dqn_forward.1} parent=1 // pred_check
      _
    $region27: #{dqn_forward.1} parent=1 // pred_check_branch
      %66 = sbr.rel (0) target = $region29
    $region28: #{dqn_forward.1} parent=1 // pred_region
      _
    $region29: #{dqn_forward.1} parent=1 // pred_fallthru
      _
    // Predicated region
    $region30: #{dqn_forward.1} parent=1 // pred_check
      _
    $region31: #{dqn_forward.1} parent=1 // pred_check_branch
      %68 = sbr.rel (0) target = $region33
    $region32: #{dqn_forward.1} parent=1 // pred_region
      %69 = dma.done [#allocation3], 256
    $region33: #{dqn_forward.1} parent=1 // pred_fallthru
      _
    // Predicated region
    $region34: #{dqn_forward.1} parent=1 // pred_check
      _
    $region35: #{dqn_forward.1} parent=1 // pred_check_branch
      %71 = sbr.rel (0) target = $region37
    $region36: #{dqn_forward.1} parent=1 // pred_region
      %72 = dma.done [#allocation5], 128
    $region37: #{dqn_forward.1} parent=1 // pred_fallthru
      _
    // Predicated region
    $region38: #{dqn_forward.1} parent=1 // pred_check
      _
    $region39: #{dqn_forward.1} parent=1 // pred_check_branch
      %74 = sbr.rel (0) target = $region41
    $region40: #{dqn_forward.1} parent=1 // pred_region
      %75 = dma.done [#allocation5], 4096
    $region41: #{dqn_forward.1} parent=1 // pred_fallthru
      _
    // Predicated region
    $region42: #{dqn_forward.1} parent=1 // pred_check
      _
    $region43: #{dqn_forward.1} parent=1 // pred_check_branch
      %77 = sbr.rel (0) target = $region45
    $region44: #{dqn_forward.1} parent=1 // pred_region
      %78 = dma.done [#allocation8], 2048
    $region45: #{dqn_forward.1} parent=1 // pred_fallthru
      _
    %v80 = vld [vmem:[#allocation2] sm:$0xff]
    %v81 = vld [vmem:[#allocation2 + $0x8] sm:$0xff]
    %v82 = vpack.c.bf16 %v81, %v80
    %v83 = vld [vmem:[#allocation4] sm:$0xff]
    %v84 = vld [vmem:[%s2] sm:$0x3]
    %v86 = vlaneseq
    %v87 = vshrl.u32 %v86, 7
    %v88 = vsub.s32 0, %v87
    %v89 = vrot.slane %v84, %v88
    %v90 = vlaneseq
    %v91 = vshrl.u32 %v90, 7
    %v92 = vsub.s32 1, %v91
    %v93 = vrot.slane %v84, %v92
    %v97 = vunpack.c.l.b16 %v83
    %v98 = vunpack.c.h.b16 %v83
    %v99 = vpack.c.b16 %v97, %v97
    %v100 = vpack.c.b16 %v98, %v98
    %vm101 = vcmask 64512
    %v103 = vsel %vm101, %v82, 0
    %vm105 = vcmask 1043456
    %v107 = vsel %vm105, %v99, 0
    %v110 = vsel %vm105, %v100, 0
    %112 = vmatprep.subr.bf16.mxu0 0
    %113 = vmatpush1.bf16.msra.mxu0 0
    %114 = vmatprep.subr.bf16.mxu0 0
    %115 = vmatpush1.bf16.msra.mxu0 0
    %116 = vmatprep.subr.bf16.mxu0 0
    %117 = vmatpush1.bf16.msra.mxu0 0
    %118 = vmatprep.subr.bf16.mxu0 0
    %119 = vmatpush1.bf16.msra.mxu0 0
    %120 = vmatprep.subr.bf16.mxu0 0
    %121 = vmatpush1.bf16.msra.mxu0 0
    %122 = vmatprep.subr.bf16.mxu0 0
    %123 = vmatpush1.bf16.msra.mxu0 0
    %124 = vmatprep.subr.bf16.mxu0 0
    %125 = vmatpush1.bf16.msra.mxu0 0
    %126 = vmatprep.subr.bf16.mxu0 %v110
    %127 = vmatpush1.bf16.msra.mxu0 %v107
    %128 = vmatprep.subr.bf16.mxu0 0
    %129 = vmatpush2.bf16.msra.mxu0 0
    %130 = vmatprep.subr.bf16.mxu0 0
    %131 = vmatpush2.bf16.msra.mxu0 0
    %132 = vmatprep.subr.bf16.mxu0 0
    %133 = vmatpush2.bf16.msra.mxu0 0
    %134 = vmatprep.subr.bf16.mxu0 0
    %135 = vmatpush2.bf16.msra.mxu0 0
    %136 = vmatprep.subr.bf16.mxu0 0
    %137 = vmatpush2.bf16.msra.mxu0 0
    %138 = vmatprep.subr.bf16.mxu0 0
    %139 = vmatpush2.bf16.msra.mxu0 0
    %140 = vmatprep.subr.bf16.mxu0 0
    %141 = vmatpush2.bf16.msra.mxu0 0
    %142 = vmatprep.subr.bf16.mxu0 0
    %143 = vmatpush2.bf16.msra.mxu0 0
    %144 = vmatprep.mubr.bf16.mxu0 0
    %145 = vmatmul.mubr.bf16.gmra.mxu0 %v103
    %v146 = vpop.f32.mrf.mxu0
    %v147 = vadd.f32 %v89, %v146
    %v148 = vpop.f32.mrf.mxu0
    %v149 = vadd.f32 %v93, %v148
    %v150 = vpop.f32.mrf.mxu0
    %v151 = vadd.f32 %v89, %v150
    %v152 = vpop.f32.mrf.mxu0
    %v153 = vadd.f32 %v93, %v152
    %154 = vdwg.mxu0
    %v155 = vpack.c.bf16 %v151, %v147
    %v156 = vpack.c.bf16 %v153, %v149
    %v157 = vmax.bf16 %v155, 0
    %v158 = vmax.bf16 %v156, 0
    %v159 = vld [vmem:[#allocation6] sm:$0xff]
    %v160 = vld [vmem:[#allocation6 + $0x8] sm:$0xff]
    %v161 = vld [vmem:[#allocation6 + $0x10] sm:$0xff]
    %v162 = vld [vmem:[#allocation6 + $0x18] sm:$0xff]
    %v163 = vld [vmem:[#allocation6 + $0x20] sm:$0xff]
    %v164 = vld [vmem:[#allocation6 + $0x28] sm:$0xff]
    %v165 = vld [vmem:[#allocation6 + $0x30] sm:$0xff]
    %v166 = vld [vmem:[#allocation6 + $0x38] sm:$0xff]
    %v167 = vld [vmem:[#allocation6 + $0x40] sm:$0xff]
    %v168 = vld [vmem:[#allocation6 + $0x48] sm:$0xff]
    %v169 = vld [vmem:[#allocation6 + $0x50] sm:$0xff]
    %v170 = vld [vmem:[#allocation6 + $0x58] sm:$0xff]
    %v171 = vld [vmem:[#allocation6 + $0x60] sm:$0xff]
    %v172 = vld [vmem:[#allocation6 + $0x68] sm:$0xff]
    %v173 = vld [vmem:[#allocation6 + $0x70] sm:$0xff]
    %v174 = vld [vmem:[#allocation6 + $0x78] sm:$0xff]
    %v175 = vld [vmem:[#allocation6 + $0x80] sm:$0xff]
    %v176 = vld [vmem:[#allocation6 + $0x88] sm:$0xff]
    %v177 = vld [vmem:[#allocation6 + $0x90] sm:$0xff]
    %v178 = vld [vmem:[#allocation6 + $0x98] sm:$0xff]
    %v179 = vld [vmem:[#allocation6 + $0xa0] sm:$0xff]
    %v180 = vld [vmem:[#allocation6 + $0xa8] sm:$0xff]
    %v181 = vld [vmem:[#allocation6 + $0xb0] sm:$0xff]
    %v182 = vld [vmem:[#allocation6 + $0xb8] sm:$0xff]
    %v183 = vld [vmem:[#allocation6 + $0xc0] sm:$0xff]
    %v184 = vld [vmem:[#allocation6 + $0xc8] sm:$0xff]
    %v185 = vld [vmem:[#allocation6 + $0xd0] sm:$0xff]
    %v186 = vld [vmem:[#allocation6 + $0xd8] sm:$0xff]
    %v187 = vld [vmem:[#allocation6 + $0xe0] sm:$0xff]
    %v188 = vld [vmem:[#allocation6 + $0xe8] sm:$0xff]
    %v189 = vld [vmem:[#allocation6 + $0xf0] sm:$0xff]
    %v190 = vld [vmem:[#allocation6 + $0xf8] sm:$0xff]
    %v191 = vld [vmem:[%s4] sm:$0x3]
    %v193 = vlaneseq
    %v194 = vshrl.u32 %v193, 7
    %v195 = vsub.s32 0, %v194
    %v196 = vrot.slane %v191, %v195
    %v197 = vlaneseq
    %v198 = vshrl.u32 %v197, 7
    %v199 = vsub.s32 1, %v198
    %v200 = vrot.slane %v191, %v199
    %v235 = vunpack.c.l.b16 %v159
    %v236 = vunpack.c.h.b16 %v159
    %v237 = vunpack.c.l.b16 %v160
    %v238 = vunpack.c.h.b16 %v160
    %v239 = vunpack.c.l.b16 %v161
    %v240 = vunpack.c.h.b16 %v161
    %v241 = vunpack.c.l.b16 %v162
    %v242 = vunpack.c.h.b16 %v162
    %v243 = vunpack.c.l.b16 %v163
    %v244 = vunpack.c.h.b16 %v163
    %v245 = vunpack.c.l.b16 %v164
    %v246 = vunpack.c.h.b16 %v164
    %v247 = vunpack.c.l.b16 %v165
    %v248 = vunpack.c.h.b16 %v165
    %v249 = vunpack.c.l.b16 %v166
    %v250 = vunpack.c.h.b16 %v166
    %v251 = vunpack.c.l.b16 %v167
    %v252 = vunpack.c.h.b16 %v167
    %v253 = vunpack.c.l.b16 %v168
    %v254 = vunpack.c.h.b16 %v168
    %v255 = vunpack.c.l.b16 %v169
    %v256 = vunpack.c.h.b16 %v169
    %v257 = vunpack.c.l.b16 %v170
    %v258 = vunpack.c.h.b16 %v170
    %v259 = vunpack.c.l.b16 %v171
    %v260 = vunpack.c.h.b16 %v171
    %v261 = vunpack.c.l.b16 %v172
    %v262 = vunpack.c.h.b16 %v172
    %v263 = vunpack.c.l.b16 %v173
    %v264 = vunpack.c.h.b16 %v173
    %v265 = vunpack.c.l.b16 %v174
    %v266 = vunpack.c.h.b16 %v174
    %v267 = vunpack.c.l.b16 %v175
    %v268 = vunpack.c.h.b16 %v175
    %v269 = vunpack.c.l.b16 %v176
    %v270 = vunpack.c.h.b16 %v176
    %v271 = vunpack.c.l.b16 %v177
    %v272 = vunpack.c.h.b16 %v177
    %v273 = vunpack.c.l.b16 %v178
    %v274 = vunpack.c.h.b16 %v178
    %v275 = vunpack.c.l.b16 %v179
    %v276 = vunpack.c.h.b16 %v179
    %v277 = vunpack.c.l.b16 %v180
    %v278 = vunpack.c.h.b16 %v180
    %v279 = vunpack.c.l.b16 %v181
    %v280 = vunpack.c.h.b16 %v181
    %v281 = vunpack.c.l.b16 %v182
    %v282 = vunpack.c.h.b16 %v182
    %v283 = vunpack.c.l.b16 %v183
    %v284 = vunpack.c.h.b16 %v183
    %v285 = vunpack.c.l.b16 %v184
    %v286 = vunpack.c.h.b16 %v184
    %v287 = vunpack.c.l.b16 %v185
    %v288 = vunpack.c.h.b16 %v185
    %v289 = vunpack.c.l.b16 %v186
    %v290 = vunpack.c.h.b16 %v186
    %v291 = vunpack.c.l.b16 %v187
    %v292 = vunpack.c.h.b16 %v187
    %v293 = vunpack.c.l.b16 %v188
    %v294 = vunpack.c.h.b16 %v188
    %v295 = vunpack.c.l.b16 %v189
    %v296 = vunpack.c.h.b16 %v189
    %v297 = vunpack.c.l.b16 %v190
    %v298 = vunpack.c.h.b16 %v190
    %v299 = vpack.c.b16 %v237, %v235
    %v300 = vpack.c.b16 %v238, %v236
    %v301 = vpack.c.b16 %v241, %v239
    %v302 = vpack.c.b16 %v242, %v240
    %v303 = vpack.c.b16 %v245, %v243
    %v304 = vpack.c.b16 %v246, %v244
    %v305 = vpack.c.b16 %v249, %v247
    %v306 = vpack.c.b16 %v250, %v248
    %v307 = vpack.c.b16 %v253, %v251
    %v308 = vpack.c.b16 %v254, %v252
    %v309 = vpack.c.b16 %v257, %v255
    %v310 = vpack.c.b16 %v258, %v256
    %v311 = vpack.c.b16 %v261, %v259
    %v312 = vpack.c.b16 %v262, %v260
    %v313 = vpack.c.b16 %v265, %v263
    %v314 = vpack.c.b16 %v266, %v264
    %v315 = vpack.c.b16 %v269, %v267
    %v316 = vpack.c.b16 %v270, %v268
    %v317 = vpack.c.b16 %v273, %v271
    %v318 = vpack.c.b16 %v274, %v272
    %v319 = vpack.c.b16 %v277, %v275
    %v320 = vpack.c.b16 %v278, %v276
    %v321 = vpack.c.b16 %v281, %v279
    %v322 = vpack.c.b16 %v282, %v280
    %v323 = vpack.c.b16 %v285, %v283
    %v324 = vpack.c.b16 %v286, %v284
    %v325 = vpack.c.b16 %v289, %v287
    %v326 = vpack.c.b16 %v290, %v288
    %v327 = vpack.c.b16 %v293, %v291
    %v328 = vpack.c.b16 %v294, %v292
    %v329 = vpack.c.b16 %v297, %v295
    %v330 = vpack.c.b16 %v298, %v296
    %363 = vmatprep.subr.bf16.mxu0 %v314
    %364 = vmatpush1.bf16.msra.mxu0 %v313
    %365 = vmatprep.subr.bf16.mxu0 %v312
    %366 = vmatpush1.bf16.msra.mxu0 %v311
    %367 = vmatprep.subr.bf16.mxu0 %v310
    %368 = vmatpush1.bf16.msra.mxu0 %v309
    %369 = vmatprep.subr.bf16.mxu0 %v308
    %370 = vmatpush1.bf16.msra.mxu0 %v307
    %371 = vmatprep.subr.bf16.mxu0 %v306
    %372 = vmatpush1.bf16.msra.mxu0 %v305
    %373 = vmatprep.subr.bf16.mxu0 %v304
    %374 = vmatpush1.bf16.msra.mxu0 %v303
    %375 = vmatprep.subr.bf16.mxu0 %v302
    %376 = vmatpush1.bf16.msra.mxu0 %v301
    %377 = vmatprep.subr.bf16.mxu0 %v300
    %378 = vmatpush1.bf16.msra.mxu0 %v299
    %379 = vmatprep.subr.bf16.mxu0 %v330
    %380 = vmatpush2.bf16.msra.mxu0 %v329
    %381 = vmatprep.subr.bf16.mxu0 %v328
    %382 = vmatpush2.bf16.msra.mxu0 %v327
    %383 = vmatprep.subr.bf16.mxu0 %v326
    %384 = vmatpush2.bf16.msra.mxu0 %v325
    %385 = vmatprep.subr.bf16.mxu0 %v324
    %386 = vmatpush2.bf16.msra.mxu0 %v323
    %387 = vmatprep.subr.bf16.mxu0 %v322
    %388 = vmatpush2.bf16.msra.mxu0 %v321
    %389 = vmatprep.subr.bf16.mxu0 %v320
    %390 = vmatpush2.bf16.msra.mxu0 %v319
    %391 = vmatprep.subr.bf16.mxu0 %v318
    %392 = vmatpush2.bf16.msra.mxu0 %v317
    %393 = vmatprep.subr.bf16.mxu0 %v316
    %394 = vmatpush2.bf16.msra.mxu0 %v315
    %395 = vmatprep.mubr.bf16.mxu0 %v158
    %396 = vmatmul.mubr.bf16.gmra.mxu0 %v157
    %v397 = vpop.f32.mrf.mxu0
    %v398 = vadd.f32 %v196, %v397
    %v399 = vpop.f32.mrf.mxu0
    %v400 = vadd.f32 %v200, %v399
    %v401 = vpop.f32.mrf.mxu0
    %v402 = vadd.f32 %v196, %v401
    %v403 = vpop.f32.mrf.mxu0
    %v404 = vadd.f32 %v200, %v403
    %405 = vdwg.mxu0
    %v406 = vpack.c.bf16 %v402, %v398
    %v407 = vpack.c.bf16 %v404, %v400
    %v408 = vmax.bf16 %v406, 0
    %v409 = vmax.bf16 %v407, 0
    %v410 = vld [vmem:[#allocation7] sm:$0xf]
    %v411 = vld [vmem:[#allocation7 + $0x4] sm:$0xf]
    %v412 = vld [vmem:[#allocation7 + $0x8] sm:$0xf]
    %v413 = vld [vmem:[#allocation7 + $0xc] sm:$0xf]
    %v414 = vld [vmem:[#allocation7 + $0x10] sm:$0xf]
    %v415 = vld [vmem:[#allocation7 + $0x14] sm:$0xf]
    %v416 = vld [vmem:[#allocation7 + $0x18] sm:$0xf]
    %v417 = vld [vmem:[#allocation7 + $0x1c] sm:$0xf]
    %v418 = vld [vmem:[#allocation7 + $0x20] sm:$0xf]
    %v419 = vld [vmem:[#allocation7 + $0x24] sm:$0xf]
    %v420 = vld [vmem:[#allocation7 + $0x28] sm:$0xf]
    %v421 = vld [vmem:[#allocation7 + $0x2c] sm:$0xf]
    %v422 = vld [vmem:[#allocation7 + $0x30] sm:$0xf]
    %v423 = vld [vmem:[#allocation7 + $0x34] sm:$0xf]
    %v424 = vld [vmem:[#allocation7 + $0x38] sm:$0xf]
    %v425 = vld [vmem:[#allocation7 + $0x3c] sm:$0xf]
    %v426 = vld [vmem:[#allocation7 + $0x40] sm:$0xf]
    %v427 = vld [vmem:[#allocation7 + $0x44] sm:$0xf]
    %v428 = vld [vmem:[#allocation7 + $0x48] sm:$0xf]
    %v429 = vld [vmem:[#allocation7 + $0x4c] sm:$0xf]
    %v430 = vld [vmem:[#allocation7 + $0x50] sm:$0xf]
    %v431 = vld [vmem:[#allocation7 + $0x54] sm:$0xf]
    %v432 = vld [vmem:[#allocation7 + $0x58] sm:$0xf]
    %v433 = vld [vmem:[#allocation7 + $0x5c] sm:$0xf]
    %v434 = vld [vmem:[#allocation7 + $0x60] sm:$0xf]
    %v435 = vld [vmem:[#allocation7 + $0x64] sm:$0xf]
    %v436 = vld [vmem:[#allocation7 + $0x68] sm:$0xf]
    %v437 = vld [vmem:[#allocation7 + $0x6c] sm:$0xf]
    %v438 = vld [vmem:[#allocation7 + $0x70] sm:$0xf]
    %v439 = vld [vmem:[#allocation7 + $0x74] sm:$0xf]
    %v440 = vld [vmem:[#allocation7 + $0x78] sm:$0xf]
    %v441 = vld [vmem:[#allocation7 + $0x7c] sm:$0xf]
    %v442 = vld [vmem:[%s6] sm:$0x1]
    %v444 = vlaneseq
    %v445 = vshrl.u32 %v444, 7
    %v446 = vsub.s32 0, %v445
    %v447 = vrot.slane %v442, %v446
    %v481 = vunpack.c.l.b16 %v410
    %v482 = vunpack.c.l.b16 %v411
    %v483 = vunpack.c.l.b16 %v412
    %v484 = vunpack.c.l.b16 %v413
    %v485 = vunpack.c.l.b16 %v414
    %v486 = vunpack.c.l.b16 %v415
    %v487 = vunpack.c.l.b16 %v416
    %v488 = vunpack.c.l.b16 %v417
    %v489 = vunpack.c.l.b16 %v418
    %v490 = vunpack.c.l.b16 %v419
    %v491 = vunpack.c.l.b16 %v420
    %v492 = vunpack.c.l.b16 %v421
    %v493 = vunpack.c.l.b16 %v422
    %v494 = vunpack.c.l.b16 %v423
    %v495 = vunpack.c.l.b16 %v424
    %v496 = vunpack.c.l.b16 %v425
    %v497 = vunpack.c.l.b16 %v426
    %v498 = vunpack.c.l.b16 %v427
    %v499 = vunpack.c.l.b16 %v428
    %v500 = vunpack.c.l.b16 %v429
    %v501 = vunpack.c.l.b16 %v430
    %v502 = vunpack.c.l.b16 %v431
    %v503 = vunpack.c.l.b16 %v432
    %v504 = vunpack.c.l.b16 %v433
    %v505 = vunpack.c.l.b16 %v434
    %v506 = vunpack.c.l.b16 %v435
    %v507 = vunpack.c.l.b16 %v436
    %v508 = vunpack.c.l.b16 %v437
    %v509 = vunpack.c.l.b16 %v438
    %v510 = vunpack.c.l.b16 %v439
    %v511 = vunpack.c.l.b16 %v440
    %v512 = vunpack.c.l.b16 %v441
    %v513 = vpack.c.b16 %v482, %v481
    %v514 = vpack.c.b16 %v484, %v483
    %v515 = vpack.c.b16 %v486, %v485
    %v516 = vpack.c.b16 %v488, %v487
    %v517 = vpack.c.b16 %v490, %v489
    %v518 = vpack.c.b16 %v492, %v491
    %v519 = vpack.c.b16 %v494, %v493
    %v520 = vpack.c.b16 %v496, %v495
    %v521 = vpack.c.b16 %v498, %v497
    %v522 = vpack.c.b16 %v500, %v499
    %v523 = vpack.c.b16 %v502, %v501
    %v524 = vpack.c.b16 %v504, %v503
    %v525 = vpack.c.b16 %v506, %v505
    %v526 = vpack.c.b16 %v508, %v507
    %v527 = vpack.c.b16 %v510, %v509
    %v528 = vpack.c.b16 %v512, %v511
    %545 = vmatprep.subr.bf16.mxu0 0
    %546 = vmatpush1.bf16.msra.mxu0 %v520
    %547 = vmatprep.subr.bf16.mxu0 0
    %548 = vmatpush1.bf16.msra.mxu0 %v519
    %549 = vmatprep.subr.bf16.mxu0 0
    %550 = vmatpush1.bf16.msra.mxu0 %v518
    %551 = vmatprep.subr.bf16.mxu0 0
    %552 = vmatpush1.bf16.msra.mxu0 %v517
    %553 = vmatprep.subr.bf16.mxu0 0
    %554 = vmatpush1.bf16.msra.mxu0 %v516
    %555 = vmatprep.subr.bf16.mxu0 0
    %556 = vmatpush1.bf16.msra.mxu0 %v515
    %557 = vmatprep.subr.bf16.mxu0 0
    %558 = vmatpush1.bf16.msra.mxu0 %v514
    %559 = vmatprep.subr.bf16.mxu0 0
    %560 = vmatpush1.bf16.msra.mxu0 %v513
    %561 = vmatprep.subr.bf16.mxu0 0
    %562 = vmatpush2.bf16.msra.mxu0 %v528
    %563 = vmatprep.subr.bf16.mxu0 0
    %564 = vmatpush2.bf16.msra.mxu0 %v527
    %565 = vmatprep.subr.bf16.mxu0 0
    %566 = vmatpush2.bf16.msra.mxu0 %v526
    %567 = vmatprep.subr.bf16.mxu0 0
    %568 = vmatpush2.bf16.msra.mxu0 %v525
    %569 = vmatprep.subr.bf16.mxu0 0
    %570 = vmatpush2.bf16.msra.mxu0 %v524
    %571 = vmatprep.subr.bf16.mxu0 0
    %572 = vmatpush2.bf16.msra.mxu0 %v523
    %573 = vmatprep.subr.bf16.mxu0 0
    %574 = vmatpush2.bf16.msra.mxu0 %v522
    %575 = vmatprep.subr.bf16.mxu0 0
    %576 = vmatpush2.bf16.msra.mxu0 %v521
    %577 = vmatprep.mubr.bf16.mxu0 %v409
    %578 = vmatmul.mubr.bf16.gmra.mxu0 %v408
    %v579 = vpop.f32.mrf.mxu0
    %v580 = vadd.f32 %v447, %v579
    %v581 = vpop.f32.mrf.mxu0
    %v582 = vpop.f32.mrf.mxu0
    %v583 = vadd.f32 %v447, %v582
    %v584 = vpop.f32.mrf.mxu0
    %585 = vdwg.mxu0
    %vm586 = vcmask 31744
    %587 = vst.msk [vmem:[%s7] sm:$0xff] %vm586, %v580
    %588 = vst.msk [vmem:[%s7 + $0x8] sm:$0xff] %vm586, %v583
    // Predicated region
    $region46: #{dqn_forward.1} parent=1 // pred_check
      _
    $region47: #{dqn_forward.1} parent=1 // pred_check_branch
      %590 = sbr.rel (0) target = $region49
    $region48: #{dqn_forward.1} parent=1 // pred_region
      _
    $region49: #{dqn_forward.1} parent=1 // pred_fallthru
      _
    // Predicated region
    $region50: #{dqn_forward.1} parent=1 // pred_check
      _
    $region51: #{dqn_forward.1} parent=1 // pred_check_branch
      %592 = sbr.rel (0) target = $region53
    $region52: #{dqn_forward.1} parent=1 // pred_region
      _
    $region53: #{dqn_forward.1} parent=1 // pred_fallthru
      _
    %593 = vsyncpa [#allocation3], 1
    %594 = vsyncpa [#allocation5], 1
    %595 = vsyncpa [#allocation8], 1

</llo_original>
